<compile_context>
chip_gen: v6e
topology: v6e:2x2x1
jax: 0.10.0
libtpu: 0.0.40
codegen_flags: <defaults>
</compile_context>

<pallas_src>
import functools
import math

import jax
import jax.numpy as jnp
from jax import lax
from jax.experimental import pallas as pl
from jax.experimental.pallas import tpu as pltpu

# ---- synthetic hyper-parameters (stand-ins for the argparse globals) --------
PATTERN_SIZE = 8      # pattern_size -> rows of memory / of `mem`
MEMORY_DIM   = 32     # memory_dim   -> feature dim of memory / d_v
HIDDEN_DIM   = 32     # hidden_dim   -> feature dim of mem/moe
MEMORY_HEAD  = 2      # memory_head  -> number of attention heads
SEQ_LEN      = 16     # length of `moe` (keys / values)
BETA         = 0.9    # momentum buffer value
EPS          = 1e-12  # guards the row-wise L2 normalization
BANK_BLOCK   = 16     # banks fused per grid step (bb*P = 128 rows on the MXU)


def _memory_update_kernel(mem_ref, moe_ref, wq_ref, wkv_ref, wo_ref,
                          memory_ref, newmem_ref, *,
                          bb, n_head, d_head, p_rows, s_rows, beta, eps):
    """Fused MHA + EMA update + row L2-normalize for `bb` memory banks.

    Refs (per grid step, all resident in VMEM):
      mem_ref    : (bb*P, HID)        query rows, bank-major
      moe_ref    : (bb*S, HID)        key/value rows, bank-major
      wq_ref     : (HID, H*dh)        packed per-head Q projection (shared)
      wkv_ref    : (HID, 2*H*dh)      packed per-head K|V projections (shared)
      wo_ref     : (H*dh, D)          packed per-head output projection (shared)
      memory_ref : (bb*P, D)          previous memory state
      newmem_ref : (bb*P, D)          updated, L2-normalized memory (output)
    """
    f32 = jnp.float32
    mem = mem_ref[...].astype(f32)
    moe = moe_ref[...].astype(f32)
    hd = n_head * d_head
    scale = 1.0 / math.sqrt(d_head)

    # One projection matmul for all heads & all banks in the block.
    q_all = jnp.dot(mem, wq_ref[...].astype(f32),
                    preferred_element_type=f32)            # (bb*P, H*dh)
    kv_all = jnp.dot(moe, wkv_ref[...].astype(f32),
                     preferred_element_type=f32)           # (bb*S, 2*H*dh)

    # Block-diagonal validity mask: row i belongs to bank i//P, col j to j//S.
    if bb > 1:
        row_bank = lax.broadcasted_iota(
            jnp.int32, (bb * p_rows, bb * s_rows), 0) // p_rows
        col_bank = lax.broadcasted_iota(
            jnp.int32, (bb * p_rows, bb * s_rows), 1) // s_rows
        same_bank = row_bank == col_bank

    heads = []
    for h in range(n_head):                     # tiny static loop, unrolled
        qh = q_all[:, h * d_head:(h + 1) * d_head]               # (bb*P, dh)
        kh = kv_all[:, h * d_head:(h + 1) * d_head]              # (bb*S, dh)
        vh = kv_all[:, hd + h * d_head: hd + (h + 1) * d_head]   # (bb*S, dh)

        # scores: q @ k^T over the head dim -> (bb*P, bb*S), one dense MXU pass
        s = lax.dot_general(qh, kh, (((1,), (1,)), ((), ())),
                            preferred_element_type=f32) * scale
        if bb > 1:
            s = jnp.where(same_bank, s, -1e30)   # mask cross-bank attention
        s = s - jnp.max(s, axis=-1, keepdims=True)
        p = jnp.exp(s)
        # exact reciprocal on the (rows, 1) sum column (hidden under MXU latency)
        p = p * (1.0 / jnp.sum(p, axis=-1, keepdims=True))
        heads.append(jnp.dot(p, vh, preferred_element_type=f32))  # (bb*P, dh)

    oh = jnp.concatenate(heads, axis=-1)                          # (bb*P, H*dh)
    out = jnp.dot(oh, wo_ref[...].astype(f32),
                  preferred_element_type=f32)                     # (bb*P, D)

    # EMA memory update:  memory = beta*memory + (1-beta)*out
    new_mem = beta * memory_ref[...].astype(f32) + (1.0 - beta) * out

    # Row-wise L2 normalization (eps guards zero rows); rsqrt runs on the EUP.
    inv_norm = lax.rsqrt(jnp.sum(new_mem * new_mem, axis=1, keepdims=True) + eps)
    newmem_ref[...] = (new_mem * inv_norm).astype(newmem_ref.dtype)


def memory_update(mem, moe, memory, wq, wkv, wo, *, n_head=MEMORY_HEAD,
                  beta=BETA, eps=EPS, bank_block=BANK_BLOCK):
    """Returns (new_memory, loss) like MemoryUpdate.forward.

    Accepts a single bank (2-D mem/moe/memory, matching the module) or a batch
    of independent banks (3-D with a leading bank axis).
    """
    squeeze = mem.ndim == 2
    if squeeze:
        mem, moe, memory = mem[None], moe[None], memory[None]

    B, P, HID = mem.shape
    _, S, _ = moe.shape
    D = memory.shape[-1]
    d_head = wq.shape[-1] // n_head
    hd = n_head * d_head

    # bb banks are fused per grid step; pad the bank axis up to a multiple.
    bb = max(1, min(bank_block, B))
    b_pad = ((B + bb - 1) // bb) * bb
    if b_pad != B:
        pad = b_pad - B
        mem = jnp.pad(mem, ((0, pad), (0, 0), (0, 0)))
        moe = jnp.pad(moe, ((0, pad), (0, 0), (0, 0)))
        memory = jnp.pad(memory, ((0, pad), (0, 0), (0, 0)))

    # Fold the bank axis into the row (M) dimension -> bank-major row slabs.
    mem2 = mem.reshape(b_pad * P, HID)
    moe2 = moe.reshape(b_pad * S, HID)
    memory2 = memory.reshape(b_pad * P, D)
    nb = b_pad // bb

    kernel = functools.partial(
        _memory_update_kernel, bb=bb, n_head=n_head, d_head=d_head,
        p_rows=P, s_rows=S, beta=beta, eps=eps)

    new2 = pl.pallas_call(
        kernel,
        out_shape=jax.ShapeDtypeStruct((b_pad * P, D), memory.dtype),
        grid_spec=pltpu.PrefetchScalarGridSpec(
            num_scalar_prefetch=0,
            grid=(nb,),
            in_specs=[
                pl.BlockSpec((bb * P, HID), lambda b: (b, 0)),
                pl.BlockSpec((bb * S, HID), lambda b: (b, 0)),
                pl.BlockSpec((HID, hd), lambda b: (0, 0)),
                pl.BlockSpec((HID, 2 * hd), lambda b: (0, 0)),
                pl.BlockSpec((hd, D), lambda b: (0, 0)),
                pl.BlockSpec((bb * P, D), lambda b: (b, 0)),
            ],
            out_specs=pl.BlockSpec((bb * P, D), lambda b: (b, 0)),
        ),
        # P8: alias the persistent memory state with the output buffer.
        input_output_aliases={5: 0},
        # TODO(synk): on v7x, pltpu.CORE_PARALLEL on this axis would shard the
        # bank blocks across both TensorCores; plain "parallel" is kept for
        # portability across v5e/v6e/v7x.
        compiler_params=pltpu.CompilerParams(
            dimension_semantics=("parallel",)),
    )(mem2, moe2, wq, wkv, wo, memory2)

    new_memory = new2.reshape(b_pad, P, D)[:B]

    # TODO(synk): bottleneck-dependent gates / auxiliary loss of the reference
    # MHA is undefined in the provided source; return 0.0 (kept out of kernel).
    loss = jnp.float32(0.0)

    if squeeze:
        new_memory = new_memory[0]
    return new_memory, loss


def _reference(mem, moe, memory, wq, wkv, wo, n_head, beta=BETA, eps=EPS):
    """Pure-JAX reference (batched over banks) for correctness checking."""
    hp = lax.Precision.HIGHEST
    d_head = wq.shape[-1] // n_head
    hd = n_head * d_head
    q = jnp.einsum('bph,hd->bpd', mem, wq, precision=hp)
    kv = jnp.einsum('bsh,hd->bsd', moe, wkv, precision=hp)
    outs = []
    for h in range(n_head):
        qh = q[..., h * d_head:(h + 1) * d_head]
        kh = kv[..., h * d_head:(h + 1) * d_head]
        vh = kv[..., hd + h * d_head: hd + (h + 1) * d_head]
        s = jnp.einsum('bpd,bsd->bps', qh, kh, precision=hp) / math.sqrt(d_head)
        p = jax.nn.softmax(s, axis=-1)
        outs.append(jnp.einsum('bps,bsd->bpd', p, vh, precision=hp))
    oh = jnp.concatenate(outs, axis=-1)
    out = jnp.einsum('bpd,de->bpe', oh, wo, precision=hp)
    new_mem = beta * memory + (1.0 - beta) * out
    norm = jnp.sqrt(jnp.sum(new_mem * new_mem, axis=-1, keepdims=True) + eps)
    return new_mem / norm


if __name__ == "__main__":
    key = jax.random.PRNGKey(0)
    ks = jax.random.split(key, 9)
    d_head = MEMORY_DIM // MEMORY_HEAD
    hd = MEMORY_HEAD * d_head

    # ---- single bank (matches the module) -----------------------------------
    mem = jax.random.normal(ks[0], (PATTERN_SIZE, HIDDEN_DIM), jnp.float32)
    moe = jax.random.normal(ks[1], (SEQ_LEN, HIDDEN_DIM), jnp.float32)
    wq = jax.random.normal(ks[2], (HIDDEN_DIM, hd), jnp.float32) * 0.1
    wkv = jax.random.normal(ks[3], (HIDDEN_DIM, 2 * hd), jnp.float32) * 0.1
    wo = jax.random.normal(ks[4], (hd, MEMORY_DIM), jnp.float32) * 0.1
    memory = jax.random.normal(ks[5], (PATTERN_SIZE, MEMORY_DIM), jnp.float32)

    expected = _reference(mem[None], moe[None], memory[None],
                          wq, wkv, wo, MEMORY_HEAD)[0]
    new_memory, loss = memory_update(mem, moe, memory, wq, wkv, wo,
                                     n_head=MEMORY_HEAD)
    jax.block_until_ready((new_memory, loss))

    norms = jnp.sqrt(jnp.sum(new_memory * new_memory, axis=-1))
    assert jnp.allclose(norms, 1.0, atol=1e-4), norms
    assert jnp.allclose(new_memory, expected, atol=2e-3, rtol=2e-3)

    # ---- batched path: many independent banks, 16 per grid step -------------
    B = 32
    mem_b = jax.random.normal(ks[6], (B, PATTERN_SIZE, HIDDEN_DIM), jnp.float32)
    moe_b = jax.random.normal(ks[7], (B, SEQ_LEN, HIDDEN_DIM), jnp.float32)
    memory_b = jax.random.normal(ks[8], (B, PATTERN_SIZE, MEMORY_DIM),
                                 jnp.float32)

    expected_b = _reference(mem_b, moe_b, memory_b, wq, wkv, wo, MEMORY_HEAD)
    new_memory_b, _ = memory_update(mem_b, moe_b, memory_b, wq, wkv, wo,
                                    n_head=MEMORY_HEAD)
    jax.block_until_ready(new_memory_b)

    norms_b = jnp.sqrt(jnp.sum(new_memory_b * new_memory_b, axis=-1))
    assert jnp.allclose(norms_b, 1.0, atol=1e-4), norms_b
    assert jnp.allclose(new_memory_b, expected_b, atol=2e-3, rtol=2e-3)

    print("KERNEL_OK")
</pallas_src>

<mosaic_0001>
module attributes {stable_mosaic.version = 11 : i64} {
  func.func @_memory_update_kernel(%arg0: i32, %arg1: memref<8x32xf32, #tpu.memory_space<vmem>>, %arg2: memref<16x32xf32, #tpu.memory_space<vmem>>, %arg3: memref<32x32xf32, #tpu.memory_space<vmem>>, %arg4: memref<32x64xf32, #tpu.memory_space<vmem>>, %arg5: memref<32x32xf32, #tpu.memory_space<vmem>>, %arg6: memref<8x32xf32, #tpu.memory_space<vmem>>, %arg7: memref<8x32xf32, #tpu.memory_space<vmem>>) attributes {dimension_semantics = [#tpu.dimension_semantics<parallel>], iteration_bounds = array<i64: 1>, scalar_prefetch = 0 : i64, scratch_operands = 0 : i64, tpu.core_type = #tpu.core_type<tc>, window_params = [{transform_indices = @transform_0, window_bounds = array<i64: 8, 32>}, {transform_indices = @transform_1, window_bounds = array<i64: 16, 32>}, {pipeline_mode = #tpu.pipeline_mode<synchronous>, transform_indices = @transform_2, window_bounds = array<i64: 32, 32>}, {pipeline_mode = #tpu.pipeline_mode<synchronous>, transform_indices = @transform_3, window_bounds = array<i64: 32, 64>}, {pipeline_mode = #tpu.pipeline_mode<synchronous>, transform_indices = @transform_4, window_bounds = array<i64: 32, 32>}, {transform_indices = @transform_5, window_bounds = array<i64: 8, 32>}, {transform_indices = @transform_6, window_bounds = array<i64: 8, 32>}]} {
    %c0 = arith.constant 0 : index
    %c0_0 = arith.constant 0 : index
    %0 = vector.load %arg1[%c0, %c0_0] : memref<8x32xf32, #tpu.memory_space<vmem>>, vector<8x32xf32>
    %c0_1 = arith.constant 0 : index
    %c0_2 = arith.constant 0 : index
    %1 = vector.load %arg2[%c0_1, %c0_2] : memref<16x32xf32, #tpu.memory_space<vmem>>, vector<16x32xf32>
    %c0_3 = arith.constant 0 : index
    %c0_4 = arith.constant 0 : index
    %2 = vector.load %arg3[%c0_3, %c0_4] : memref<32x32xf32, #tpu.memory_space<vmem>>, vector<32x32xf32>
    %cst = arith.constant dense<0.000000e+00> : vector<8x32xf32>
    %3 = tpu.matmul %0, %2, %cst {dimension_numbers = #tpu.dot_dimension_numbers<[1], [0], [0], [1], [0, 0, 1, 1], [], []>} : vector<8x32xf32>, vector<32x32xf32>, vector<8x32xf32> -> vector<8x32xf32>
    %c0_5 = arith.constant 0 : index
    %c0_6 = arith.constant 0 : index
    %4 = vector.load %arg4[%c0_5, %c0_6] : memref<32x64xf32, #tpu.memory_space<vmem>>, vector<32x64xf32>
    %cst_7 = arith.constant dense<0.000000e+00> : vector<16x64xf32>
    %5 = tpu.matmul %1, %4, %cst_7 {dimension_numbers = #tpu.dot_dimension_numbers<[1], [0], [0], [1], [0, 0, 1, 1], [], []>} : vector<16x32xf32>, vector<32x64xf32>, vector<16x64xf32> -> vector<16x64xf32>
    %6 = vector.extract_strided_slice %3 {offsets = [0, 0], sizes = [8, 16], strides = [1, 1]} : vector<8x32xf32> to vector<8x16xf32>
    %7 = vector.extract_strided_slice %5 {offsets = [0, 0], sizes = [16, 16], strides = [1, 1]} : vector<16x64xf32> to vector<16x16xf32>
    %8 = vector.extract_strided_slice %5 {offsets = [0, 32], sizes = [16, 16], strides = [1, 1]} : vector<16x64xf32> to vector<16x16xf32>
    %cst_8 = arith.constant dense<0.000000e+00> : vector<8x16xf32>
    %9 = tpu.matmul %6, %7, %cst_8 {dimension_numbers = #tpu.dot_dimension_numbers<[1], [1], [0], [0], [0, 0, 1, 0], [], []>} : vector<8x16xf32>, vector<16x16xf32>, vector<8x16xf32> -> vector<8x16xf32>
    %cst_9 = arith.constant 2.500000e-01 : f32
    %10 = vector.broadcast %cst_9 : f32 to vector<8x16xf32>
    %11 = arith.mulf %9, %10 : vector<8x16xf32>
    %cst_10 = arith.constant dense<0xFF800000> : vector<8xf32>
    %12 = vector.multi_reduction <maximumf>, %11, %cst_10 [1] : vector<8x16xf32> to vector<8xf32>
    %13 = vector.shape_cast %12 : vector<8xf32> to vector<8x1xf32>
    %14 = vector.broadcast %13 : vector<8x1xf32> to vector<8x16xf32>
    %15 = arith.subf %11, %14 : vector<8x16xf32>
    %16 = math.exp %15 : vector<8x16xf32>
    %cst_11 = arith.constant dense<0.000000e+00> : vector<8xf32>
    %17 = vector.multi_reduction <add>, %16, %cst_11 [1] : vector<8x16xf32> to vector<8xf32>
    %18 = vector.shape_cast %17 : vector<8xf32> to vector<8x1xf32>
    %cst_12 = arith.constant 1.000000e+00 : f32
    %19 = vector.broadcast %cst_12 : f32 to vector<8x1xf32>
    %20 = arith.divf %19, %18 : vector<8x1xf32>
    %21 = vector.broadcast %20 : vector<8x1xf32> to vector<8x16xf32>
    %22 = arith.mulf %16, %21 : vector<8x16xf32>
    %cst_13 = arith.constant dense<0.000000e+00> : vector<8x16xf32>
    %23 = tpu.matmul %22, %8, %cst_13 {dimension_numbers = #tpu.dot_dimension_numbers<[1], [0], [0], [1], [0, 0, 1, 1], [], []>} : vector<8x16xf32>, vector<16x16xf32>, vector<8x16xf32> -> vector<8x16xf32>
    %24 = vector.extract_strided_slice %3 {offsets = [0, 16], sizes = [8, 16], strides = [1, 1]} : vector<8x32xf32> to vector<8x16xf32>
    %25 = vector.extract_strided_slice %5 {offsets = [0, 16], sizes = [16, 16], strides = [1, 1]} : vector<16x64xf32> to vector<16x16xf32>
    %26 = vector.extract_strided_slice %5 {offsets = [0, 48], sizes = [16, 16], strides = [1, 1]} : vector<16x64xf32> to vector<16x16xf32>
    %cst_14 = arith.constant dense<0.000000e+00> : vector<8x16xf32>
    %27 = tpu.matmul %24, %25, %cst_14 {dimension_numbers = #tpu.dot_dimension_numbers<[1], [1], [0], [0], [0, 0, 1, 0], [], []>} : vector<8x16xf32>, vector<16x16xf32>, vector<8x16xf32> -> vector<8x16xf32>
    %cst_15 = arith.constant 2.500000e-01 : f32
    %28 = vector.broadcast %cst_15 : f32 to vector<8x16xf32>
    %29 = arith.mulf %27, %28 : vector<8x16xf32>
    %cst_16 = arith.constant dense<0xFF800000> : vector<8xf32>
    %30 = vector.multi_reduction <maximumf>, %29, %cst_16 [1] : vector<8x16xf32> to vector<8xf32>
    %31 = vector.shape_cast %30 : vector<8xf32> to vector<8x1xf32>
    %32 = vector.broadcast %31 : vector<8x1xf32> to vector<8x16xf32>
    %33 = arith.subf %29, %32 : vector<8x16xf32>
    %34 = math.exp %33 : vector<8x16xf32>
    %cst_17 = arith.constant dense<0.000000e+00> : vector<8xf32>
    %35 = vector.multi_reduction <add>, %34, %cst_17 [1] : vector<8x16xf32> to vector<8xf32>
    %36 = vector.shape_cast %35 : vector<8xf32> to vector<8x1xf32>
    %cst_18 = arith.constant 1.000000e+00 : f32
    %37 = vector.broadcast %cst_18 : f32 to vector<8x1xf32>
    %38 = arith.divf %37, %36 : vector<8x1xf32>
    %39 = vector.broadcast %38 : vector<8x1xf32> to vector<8x16xf32>
    %40 = arith.mulf %34, %39 : vector<8x16xf32>
    %cst_19 = arith.constant dense<0.000000e+00> : vector<8x16xf32>
    %41 = tpu.matmul %40, %26, %cst_19 {dimension_numbers = #tpu.dot_dimension_numbers<[1], [0], [0], [1], [0, 0, 1, 1], [], []>} : vector<8x16xf32>, vector<16x16xf32>, vector<8x16xf32> -> vector<8x16xf32>
    %42 = tpu.concatenate %23, %41 in 1 : vector<8x16xf32>, vector<8x16xf32> -> vector<8x32xf32>
    %c0_20 = arith.constant 0 : index
    %c0_21 = arith.constant 0 : index
    %43 = vector.load %arg5[%c0_20, %c0_21] : memref<32x32xf32, #tpu.memory_space<vmem>>, vector<32x32xf32>
    %cst_22 = arith.constant dense<0.000000e+00> : vector<8x32xf32>
    %44 = tpu.matmul %42, %43, %cst_22 {dimension_numbers = #tpu.dot_dimension_numbers<[1], [0], [0], [1], [0, 0, 1, 1], [], []>} : vector<8x32xf32>, vector<32x32xf32>, vector<8x32xf32> -> vector<8x32xf32>
    %c0_23 = arith.constant 0 : index
    %c0_24 = arith.constant 0 : index
    %45 = vector.load %arg6[%c0_23, %c0_24] : memref<8x32xf32, #tpu.memory_space<vmem>>, vector<8x32xf32>
    %cst_25 = arith.constant 0.899999976 : f32
    %46 = vector.broadcast %cst_25 : f32 to vector<8x32xf32>
    %47 = arith.mulf %46, %45 : vector<8x32xf32>
    %cst_26 = arith.constant 1.000000e-01 : f32
    %48 = vector.broadcast %cst_26 : f32 to vector<8x32xf32>
    %49 = arith.mulf %48, %44 : vector<8x32xf32>
    %50 = arith.addf %47, %49 : vector<8x32xf32>
    %51 = arith.mulf %50, %50 : vector<8x32xf32>
    %cst_27 = arith.constant dense<0.000000e+00> : vector<8xf32>
    %52 = vector.multi_reduction <add>, %51, %cst_27 [1] : vector<8x32xf32> to vector<8xf32>
    %53 = vector.shape_cast %52 : vector<8xf32> to vector<8x1xf32>
    %cst_28 = arith.constant 9.99999996E-13 : f32
    %54 = vector.broadcast %cst_28 : f32 to vector<8x1xf32>
    %55 = arith.addf %53, %54 : vector<8x1xf32>
    %56 = math.rsqrt %55 : vector<8x1xf32>
    %57 = vector.broadcast %56 : vector<8x1xf32> to vector<8x32xf32>
    %58 = arith.mulf %50, %57 : vector<8x32xf32>
    %c0_29 = arith.constant 0 : index
    %c0_30 = arith.constant 0 : index
    %59 = vector.load %arg7[%c0_29, %c0_30] : memref<8x32xf32, #tpu.memory_space<vmem>>, vector<8x32xf32>
    tpu.vector_store %arg7[%c0_29, %c0_30], %58 {strides = array<i32>} : memref<8x32xf32, #tpu.memory_space<vmem>>, vector<8x32xf32>,
    return
  }
  func.func @transform_0(%arg0: i32) -> (i32, i32) {
    %c0_i32 = arith.constant 0 : i32
    %c0_i32_0 = arith.constant 0 : i32
    return %arg0, %c0_i32 : i32, i32
  }
  func.func @transform_1(%arg0: i32) -> (i32, i32) {
    %c0_i32 = arith.constant 0 : i32
    %c0_i32_0 = arith.constant 0 : i32
    return %arg0, %c0_i32 : i32, i32
  }
  func.func @transform_2(%arg0: i32) -> (i32, i32) {
    %c0_i32 = arith.constant 0 : i32
    %c0_i32_0 = arith.constant 0 : i32
    %c0_i32_1 = arith.constant 0 : i32
    return %c0_i32, %c0_i32_0 : i32, i32
  }
  func.func @transform_3(%arg0: i32) -> (i32, i32) {
    %c0_i32 = arith.constant 0 : i32
    %c0_i32_0 = arith.constant 0 : i32
    %c0_i32_1 = arith.constant 0 : i32
    return %c0_i32, %c0_i32_0 : i32, i32
  }
  func.func @transform_4(%arg0: i32) -> (i32, i32) {
    %c0_i32 = arith.constant 0 : i32
    %c0_i32_0 = arith.constant 0 : i32
    %c0_i32_1 = arith.constant 0 : i32
    return %c0_i32, %c0_i32_0 : i32, i32
  }
  func.func @transform_5(%arg0: i32) -> (i32, i32) {
    %c0_i32 = arith.constant 0 : i32
    %c0_i32_0 = arith.constant 0 : i32
    return %arg0, %c0_i32 : i32, i32
  }
  func.func @transform_6(%arg0: i32) -> (i32, i32) {
    %c0_i32 = arith.constant 0 : i32
    %c0_i32_0 = arith.constant 0 : i32
    return %arg0, %c0_i32 : i32, i32
  }
}

</mosaic_0001>

<llo_original>
// kernel: tpu_custom_call.1
$region0: #{tpu_custom_call.1}
  #allocation0 [shape = 'u32[]', space=smem, size = 0x4, offset = 0x4, fixed_abs, tag = 'smem constant byte address 0x4 - core index']
  #allocation1 [shape = 'u32[144,128]{1,0:T(1,128)}', space=vmem, size = 0x12000, scoped, tag = 'internal scratch']
  %s0 = inlined_call_operand.vmem [shape: f32[8,32], index: 0, kind: input, shape index: {}]
  %s1 = inlined_call_operand.vmem [shape: f32[16,32], index: 1, kind: input, shape index: {}]
  %s2 = inlined_call_operand.hbm [shape: f32[32,32], index: 2, kind: input, shape index: {}]
  %s3 = inlined_call_operand.hbm [shape: f32[32,64], index: 3, kind: input, shape index: {}]
  %s4 = inlined_call_operand.hbm [shape: f32[32,32], index: 4, kind: input, shape index: {}]
  %s5 = inlined_call_operand.hbm [shape: f32[8,32], index: 5, kind: input, shape index: {}, may-alias: {5,6}]
  %s6 = inlined_call_operand.hbm [shape: f32[8,32], index: 6, kind: output, shape index: {}, may-alias: {5,6}]
  %s7 = sld [smem:[#allocation0]]
  $region50: #{tpu_custom_call.1} parent=0
    _
  %s9 = ssub.s32 1, %s7
  %s10 = scalar_select 0, %s9, %s7
  $region1: #{tpu_custom_call.1} parent=0
    #allocation2 [shape = 'u8[16384]{0}', space=vmem, size = 0x4000, scoped, tag = 'input window, operand 2, single buffered']
    #allocation3 [shape = 's32[1]{0}', space=sflag, size = 0x4, scoped, tag = 'scoped memory for tpu_custom_call.1']
    #allocation4 [shape = 's32[1]{0}', space=sflag, size = 0x4, scoped, tag = 'scoped memory for tpu_custom_call.1']
    #allocation5 [shape = 'u8[16384]{0}', space=vmem, size = 0x4000, scoped, tag = 'input window, operand 3, single buffered']
    #allocation6 [shape = 's32[1]{0}', space=sflag, size = 0x4, scoped, tag = 'scoped memory for tpu_custom_call.1']
    #allocation7 [shape = 'u8[16384]{0}', space=vmem, size = 0x4000, scoped, tag = 'input window, operand 4, single buffered']
    #allocation8 [shape = 'u8[4096]{0}', space=vmem, size = 0x1000, scoped, tag = 'input window, operand 5, single buffered']
    #allocation9 [shape = 's32[1]{0}', space=sflag, size = 0x4, scoped, tag = 'scoped memory for tpu_custom_call.1']
    #allocation10 [shape = 'u8[4096]{0}', space=vmem, size = 0x1000, scoped, tag = 'output window, operand 0, single buffered']
    %11 = vsyncpa [#allocation3], 0
    %12 = vsyncpa [#allocation6], 0
    %13 = vsyncpa [#allocation9], 0
    %14 = vsyncpa [#allocation4], 0
    // Predicated region
    $region2: #{tpu_custom_call.1} parent=1 // pred_check
      _
    $region3: #{tpu_custom_call.1} parent=1 // pred_check_branch
      %16 = sbr.rel (0) target = $region5
    $region4: #{tpu_custom_call.1} parent=1 // pred_region
      _
    $region5: #{tpu_custom_call.1} parent=1 // pred_fallthru
      _
    // Predicated region
    $region6: #{tpu_custom_call.1} parent=1 // pred_check
      _
    $region7: #{tpu_custom_call.1} parent=1 // pred_check_branch
      %18 = sbr.rel (0) target = $region9
    $region8: #{tpu_custom_call.1} parent=1 // pred_region
      _
    $region9: #{tpu_custom_call.1} parent=1 // pred_fallthru
      _
    // Predicated region
    $region10: #{tpu_custom_call.1} parent=1 // pred_check
      _
    $region11: #{tpu_custom_call.1} parent=1 // pred_check_branch
      %20 = sbr.rel (0) target = $region13
    $region12: #{tpu_custom_call.1} parent=1 // pred_region
      %s22 = ssub.s32 512, 512
      %23 = vsyncadd [#allocation3], %s22
      %s24 = sshll.u32 [#allocation2], 4
      %s25 = int_to_ptr.vmem [resolvable:$true] %s24
      %30 = dma.hbm_to_vmem [thread:$0]  %s2, 512, %s25, [#allocation3], 128, 128, 8
    $region13: #{tpu_custom_call.1} parent=1 // pred_fallthru
      _
    // Predicated region
    $region14: #{tpu_custom_call.1} parent=1 // pred_check
      _
    $region15: #{tpu_custom_call.1} parent=1 // pred_check_branch
      %32 = sbr.rel (0) target = $region17
    $region16: #{tpu_custom_call.1} parent=1 // pred_region
      %s34 = ssub.s32 512, 512
      %35 = vsyncadd [#allocation6], %s34
      %s36 = sshll.u32 [#allocation5], 4
      %s37 = int_to_ptr.vmem [resolvable:$true] %s36
      %42 = dma.hbm_to_vmem [thread:$0]  %s3, 512, %s37, [#allocation6], 128, 128, 8
    $region17: #{tpu_custom_call.1} parent=1 // pred_fallthru
      _
    // Predicated region
    $region18: #{tpu_custom_call.1} parent=1 // pred_check
      _
    $region19: #{tpu_custom_call.1} parent=1 // pred_check_branch
      %44 = sbr.rel (0) target = $region21
    $region20: #{tpu_custom_call.1} parent=1 // pred_region
      %s46 = ssub.s32 512, 512
      %47 = vsyncadd [#allocation6], %s46
      %s48 = sshll.u32 [#allocation7], 4
      %s49 = int_to_ptr.vmem [resolvable:$true] %s48
      %54 = dma.hbm_to_vmem [thread:$0]  %s4, 512, %s49, [#allocation6], 128, 128, 8
    $region21: #{tpu_custom_call.1} parent=1 // pred_fallthru
      _
    // Predicated region
    $region22: #{tpu_custom_call.1} parent=1 // pred_check
      _
    $region23: #{tpu_custom_call.1} parent=1 // pred_check_branch
      %56 = sbr.rel (0) target = $region25
    $region24: #{tpu_custom_call.1} parent=1 // pred_region
      %s58 = ssub.s32 128, 128
      %59 = vsyncadd [#allocation9], %s58
      %s61 = sshll.u32 [#allocation8], 4
      %s62 = int_to_ptr.vmem [resolvable:$true] %s61
      %64 = dma.hbm_to_vmem [thread:$0]  %s5, 128, %s62, [#allocation9]
    $region25: #{tpu_custom_call.1} parent=1 // pred_fallthru
      _
    // Predicated region
    $region26: #{tpu_custom_call.1} parent=1 // pred_check
      _
    $region27: #{tpu_custom_call.1} parent=1 // pred_check_branch
      %66 = sbr.rel (0) target = $region29
    $region28: #{tpu_custom_call.1} parent=1 // pred_region
      %67 = dma.done [#allocation3], 512
    $region29: #{tpu_custom_call.1} parent=1 // pred_fallthru
      _
    // Predicated region
    $region30: #{tpu_custom_call.1} parent=1 // pred_check
      _
    $region31: #{tpu_custom_call.1} parent=1 // pred_check_branch
      %69 = sbr.rel (0) target = $region33
    $region32: #{tpu_custom_call.1} parent=1 // pred_region
      %70 = dma.done [#allocation6], 512
    $region33: #{tpu_custom_call.1} parent=1 // pred_fallthru
      _
    // Predicated region
    $region34: #{tpu_custom_call.1} parent=1 // pred_check
      _
    $region35: #{tpu_custom_call.1} parent=1 // pred_check_branch
      %72 = sbr.rel (0) target = $region37
    $region36: #{tpu_custom_call.1} parent=1 // pred_region
      %73 = dma.done [#allocation6], 512
    $region37: #{tpu_custom_call.1} parent=1 // pred_fallthru
      _
    // Predicated region
    $region38: #{tpu_custom_call.1} parent=1 // pred_check
      _
    $region39: #{tpu_custom_call.1} parent=1 // pred_check_branch
      %75 = sbr.rel (0) target = $region41
    $region40: #{tpu_custom_call.1} parent=1 // pred_region
      %76 = dma.done [#allocation9], 128
    $region41: #{tpu_custom_call.1} parent=1 // pred_fallthru
      _
    %v77 = vld [vmem:[%s0] sm:$0xff]
    %v78 = vld [vmem:[%s1] sm:$0xff]
    %v79 = vld [vmem:[%s1 + $0x8] sm:$0xff]
    %v80 = vld [vmem:[#allocation2] sm:$0xff]
    %v81 = vld [vmem:[#allocation2 + $0x8] sm:$0xff]
    %v82 = vld [vmem:[#allocation2 + $0x10] sm:$0xff]
    %v83 = vld [vmem:[#allocation2 + $0x18] sm:$0xff]
    %vm84 = vcmask 261120
    %v86 = vsel %vm84, %v77, 0
    %88 = vmatprep.subr.mxu0 0.0
    %89 = vmatpush1.msra.mxu0 0.0
    %90 = vmatprep.subr.mxu0 0.0
    %91 = vmatpush1.msra.mxu0 0.0
    %92 = vmatprep.subr.mxu0 0.0
    %93 = vmatpush1.msra.mxu0 0.0
    %94 = vmatprep.subr.mxu0 0.0
    %95 = vmatpush1.msra.mxu0 0.0
    %96 = vmatprep.subr.mxu0 0.0
    %97 = vmatpush1.msra.mxu0 0.0
    %98 = vmatprep.subr.mxu0 0.0
    %99 = vmatpush1.msra.mxu0 0.0
    %100 = vmatprep.subr.mxu0 0.0
    %101 = vmatpush1.msra.mxu0 0.0
    %102 = vmatprep.subr.mxu0 0.0
    %103 = vmatpush1.msra.mxu0 0.0
    %104 = vmatprep.subr.mxu0 0.0
    %105 = vmatpush1.msra.mxu0 0.0
    %106 = vmatprep.subr.mxu0 0.0
    %107 = vmatpush1.msra.mxu0 0.0
    %108 = vmatprep.subr.mxu0 0.0
    %109 = vmatpush1.msra.mxu0 0.0
    %110 = vmatprep.subr.mxu0 0.0
    %111 = vmatpush1.msra.mxu0 0.0
    %112 = vmatprep.subr.mxu0 0.0
    %113 = vmatpush1.msra.mxu0 %v83
    %114 = vmatprep.subr.mxu0 0.0
    %115 = vmatpush1.msra.mxu0 %v82
    %116 = vmatprep.subr.mxu0 0.0
    %117 = vmatpush1.msra.mxu0 %v81
    %118 = vmatprep.subr.mxu0 0.0
    %119 = vmatpush1.msra.mxu0 %v80
    %120 = vmatprep.subr.mxu0 0.0
    %121 = vmatpush2.msra.mxu0 0.0
    %122 = vmatprep.subr.mxu0 0.0
    %123 = vmatpush2.msra.mxu0 0.0
    %124 = vmatprep.subr.mxu0 0.0
    %125 = vmatpush2.msra.mxu0 0.0
    %126 = vmatprep.subr.mxu0 0.0
    %127 = vmatpush2.msra.mxu0 0.0
    %128 = vmatprep.subr.mxu0 0.0
    %129 = vmatpush2.msra.mxu0 0.0
    %130 = vmatprep.subr.mxu0 0.0
    %131 = vmatpush2.msra.mxu0 0.0
    %132 = vmatprep.subr.mxu0 0.0
    %133 = vmatpush2.msra.mxu0 0.0
    %134 = vmatprep.subr.mxu0 0.0
    %135 = vmatpush2.msra.mxu0 0.0
    %136 = vmatprep.subr.mxu0 0.0
    %137 = vmatpush2.msra.mxu0 0.0
    %138 = vmatprep.subr.mxu0 0.0
    %139 = vmatpush2.msra.mxu0 0.0
    %140 = vmatprep.subr.mxu0 0.0
    %141 = vmatpush2.msra.mxu0 0.0
    %142 = vmatprep.subr.mxu0 0.0
    %143 = vmatpush2.msra.mxu0 0.0
    %144 = vmatprep.subr.mxu0 0.0
    %145 = vmatpush2.msra.mxu0 0.0
    %146 = vmatprep.subr.mxu0 0.0
    %147 = vmatpush2.msra.mxu0 0.0
    %148 = vmatprep.subr.mxu0 0.0
    %149 = vmatpush2.msra.mxu0 0.0
    %150 = vmatprep.subr.mxu0 0.0
    %151 = vmatpush2.msra.mxu0 0.0
    %152 = vmatprep.mubr.f32.mxu0 0.0
    %153 = vmatmul.mubr.f32.gmra.mxu0 %v86
    %v154 = vpop.f32.mrf.mxu0
    %v155 = vadd.f32 0.0, %v154
    %v156 = vpop.f32.mrf.mxu0
    %157 = vdwg.mxu0
    %v158 = vld [vmem:[#allocation5] sm:$0xff]
    %v159 = vld [vmem:[#allocation5 + $0x8] sm:$0xff]
    %v160 = vld [vmem:[#allocation5 + $0x10] sm:$0xff]
    %v161 = vld [vmem:[#allocation5 + $0x18] sm:$0xff]
    %v163 = vsel %vm84, %v78, 0
    %v166 = vsel %vm84, %v79, 0
    %168 = vmatprep.subr.mxu0 0.0
    %169 = vmatpush1.msra.mxu0 0.0
    %170 = vmatprep.subr.mxu0 0.0
    %171 = vmatpush1.msra.mxu0 0.0
    %172 = vmatprep.subr.mxu0 0.0
    %173 = vmatpush1.msra.mxu0 0.0
    %174 = vmatprep.subr.mxu0 0.0
    %175 = vmatpush1.msra.mxu0 0.0
    %176 = vmatprep.subr.mxu0 0.0
    %177 = vmatpush1.msra.mxu0 0.0
    %178 = vmatprep.subr.mxu0 0.0
    %179 = vmatpush1.msra.mxu0 0.0
    %180 = vmatprep.subr.mxu0 0.0
    %181 = vmatpush1.msra.mxu0 0.0
    %182 = vmatprep.subr.mxu0 0.0
    %183 = vmatpush1.msra.mxu0 0.0
    %184 = vmatprep.subr.mxu0 0.0
    %185 = vmatpush1.msra.mxu0 0.0
    %186 = vmatprep.subr.mxu0 0.0
    %187 = vmatpush1.msra.mxu0 0.0
    %188 = vmatprep.subr.mxu0 0.0
    %189 = vmatpush1.msra.mxu0 0.0
    %190 = vmatprep.subr.mxu0 0.0
    %191 = vmatpush1.msra.mxu0 0.0
    %192 = vmatprep.subr.mxu0 0.0
    %193 = vmatpush1.msra.mxu0 %v161
    %194 = vmatprep.subr.mxu0 0.0
    %195 = vmatpush1.msra.mxu0 %v160
    %196 = vmatprep.subr.mxu0 0.0
    %197 = vmatpush1.msra.mxu0 %v159
    %198 = vmatprep.subr.mxu0 0.0
    %199 = vmatpush1.msra.mxu0 %v158
    %200 = vmatprep.subr.mxu0 0.0
    %201 = vmatpush2.msra.mxu0 0.0
    %202 = vmatprep.subr.mxu0 0.0
    %203 = vmatpush2.msra.mxu0 0.0
    %204 = vmatprep.subr.mxu0 0.0
    %205 = vmatpush2.msra.mxu0 0.0
    %206 = vmatprep.subr.mxu0 0.0
    %207 = vmatpush2.msra.mxu0 0.0
    %208 = vmatprep.subr.mxu0 0.0
    %209 = vmatpush2.msra.mxu0 0.0
    %210 = vmatprep.subr.mxu0 0.0
    %211 = vmatpush2.msra.mxu0 0.0
    %212 = vmatprep.subr.mxu0 0.0
    %213 = vmatpush2.msra.mxu0 0.0
    %214 = vmatprep.subr.mxu0 0.0
    %215 = vmatpush2.msra.mxu0 0.0
    %216 = vmatprep.subr.mxu0 0.0
    %217 = vmatpush2.msra.mxu0 0.0
    %218 = vmatprep.subr.mxu0 0.0
    %219 = vmatpush2.msra.mxu0 0.0
    %220 = vmatprep.subr.mxu0 0.0
    %221 = vmatpush2.msra.mxu0 0.0
    %222 = vmatprep.subr.mxu0 0.0
    %223 = vmatpush2.msra.mxu0 0.0
    %224 = vmatprep.subr.mxu0 0.0
    %225 = vmatpush2.msra.mxu0 0.0
    %226 = vmatprep.subr.mxu0 0.0
    %227 = vmatpush2.msra.mxu0 0.0
    %228 = vmatprep.subr.mxu0 0.0
    %229 = vmatpush2.msra.mxu0 0.0
    %230 = vmatprep.subr.mxu0 0.0
    %231 = vmatpush2.msra.mxu0 0.0
    %232 = vmatprep.mubr.f32.mxu0 0.0
    %233 = vmatmul.mubr.f32.gmra.mxu0 %v163
    %v234 = vpop.f32.mrf.mxu0
    %v235 = vadd.f32 0.0, %v234
    %v236 = vpop.f32.mrf.mxu0
    %237 = vmatprep.mubr.f32.mxu0 0.0
    %238 = vmatmul.mubr.f32.gmra.mxu0 %v166
    %v239 = vpop.f32.mrf.mxu0
    %v240 = vadd.f32 0.0, %v239
    %v241 = vpop.f32.mrf.mxu0
    %242 = vdwg.mxu0
    %vm243 = vcmask 130048
    %v245 = vsel %vm243, %v155, 0
    %v248 = vsel %vm243, %v235, 0
    %v251 = vsel %vm243, %v240, 0
    %253 = vmatprep.subr.mxu0 0.0
    %254 = vmatpush1.xpose.msra.mxu0 0.0
    %255 = vmatprep.subr.mxu0 0.0
    %256 = vmatpush1.xpose.msra.mxu0 0.0
    %257 = vmatprep.subr.mxu0 0.0
    %258 = vmatpush1.xpose.msra.mxu0 0.0
    %259 = vmatprep.subr.mxu0 0.0
    %260 = vmatpush1.xpose.msra.mxu0 0.0
    %261 = vmatprep.subr.mxu0 0.0
    %262 = vmatpush1.xpose.msra.mxu0 0.0
    %263 = vmatprep.subr.mxu0 0.0
    %264 = vmatpush1.xpose.msra.mxu0 0.0
    %265 = vmatprep.subr.mxu0 0.0
    %266 = vmatpush1.xpose.msra.mxu0 0.0
    %267 = vmatprep.subr.mxu0 0.0
    %268 = vmatpush1.xpose.msra.mxu0 0.0
    %269 = vmatprep.subr.mxu0 0.0
    %270 = vmatpush1.xpose.msra.mxu0 0.0
    %271 = vmatprep.subr.mxu0 0.0
    %272 = vmatpush1.xpose.msra.mxu0 0.0
    %273 = vmatprep.subr.mxu0 0.0
    %274 = vmatpush1.xpose.msra.mxu0 0.0
    %275 = vmatprep.subr.mxu0 0.0
    %276 = vmatpush1.xpose.msra.mxu0 0.0
    %277 = vmatprep.subr.mxu0 0.0
    %278 = vmatpush1.xpose.msra.mxu0 0.0
    %279 = vmatprep.subr.mxu0 0.0
    %280 = vmatpush1.xpose.msra.mxu0 0.0
    %281 = vmatprep.subr.mxu0 0.0
    %282 = vmatpush1.xpose.msra.mxu0 %v251
    %283 = vmatprep.subr.mxu0 0.0
    %284 = vmatpush1.xpose.msra.mxu0 %v248
    %285 = vmatprep.subr.mxu0 0.0
    %286 = vmatpush2.xpose.msra.mxu0 0.0
    %287 = vmatprep.subr.mxu0 0.0
    %288 = vmatpush2.xpose.msra.mxu0 0.0
    %289 = vmatprep.subr.mxu0 0.0
    %290 = vmatpush2.xpose.msra.mxu0 0.0
    %291 = vmatprep.subr.mxu0 0.0
    %292 = vmatpush2.xpose.msra.mxu0 0.0
    %293 = vmatprep.subr.mxu0 0.0
    %294 = vmatpush2.xpose.msra.mxu0 0.0
    %295 = vmatprep.subr.mxu0 0.0
    %296 = vmatpush2.xpose.msra.mxu0 0.0
    %297 = vmatprep.subr.mxu0 0.0
    %298 = vmatpush2.xpose.msra.mxu0 0.0
    %299 = vmatprep.subr.mxu0 0.0
    %300 = vmatpush2.xpose.msra.mxu0 0.0
    %301 = vmatprep.subr.mxu0 0.0
    %302 = vmatpush2.xpose.msra.mxu0 0.0
    %303 = vmatprep.subr.mxu0 0.0
    %304 = vmatpush2.xpose.msra.mxu0 0.0
    %305 = vmatprep.subr.mxu0 0.0
    %306 = vmatpush2.xpose.msra.mxu0 0.0
    %307 = vmatprep.subr.mxu0 0.0
    %308 = vmatpush2.xpose.msra.mxu0 0.0
    %309 = vmatprep.subr.mxu0 0.0
    %310 = vmatpush2.xpose.msra.mxu0 0.0
    %311 = vmatprep.subr.mxu0 0.0
    %312 = vmatpush2.xpose.msra.mxu0 0.0
    %313 = vmatprep.subr.mxu0 0.0
    %314 = vmatpush2.xpose.msra.mxu0 0.0
    %315 = vmatprep.subr.mxu0 0.0
    %316 = vmatpush2.xpose.msra.mxu0 0.0
    %317 = vmatprep.mubr.f32.mxu0 0.0
    %318 = vmatmul.mubr.f32.gmra.mxu0 %v245
    %v319 = vpop.f32.mrf.mxu0
    %v320 = vadd.f32 0.0, %v319
    %v321 = vpop.f32.mrf.mxu0
    %322 = vdwg.mxu0
    %v323 = vmul.f32 %v320, 0.25
    %v324 = vsel %vm243, %v323, -inf
    %325 = vmax.xlane.f32.xlu0 %v324
    %v326 = vpop.xlane.xlu0 %325
    %v327 = vsub.f32 %v323, %v326
    %v328 = vmul.f32 %v327, 1.442695
    %v329 = vpow.pop %v328
    %v330 = vsel %vm243, %v329, 0.0
    %331 = vadd.xlane.f32.xlu0 %v330
    %v332 = vpop.xlane.xlu0 %331
    %v333 = vrcp.pop %v332
    %v334 = vmul.f32 1.0, %v333
    %v335 = vmul.f32 %v329, %v334
    %336 = vrot.lane.b32.xlu0 %v235, 96
    %v337 = vpop.permute.xlu0 %336
    %338 = vrot.lane.b32.xlu0 %v240, 96
    %v339 = vpop.permute.xlu0 %338
    %v343 = vsel %vm243, %v335, 0
    %345 = vmatprep.subr.mxu0 0.0
    %346 = vmatpush1.msra.mxu0 0.0
    %347 = vmatprep.subr.mxu0 0.0
    %348 = vmatpush1.msra.mxu0 0.0
    %349 = vmatprep.subr.mxu0 0.0
    %350 = vmatpush1.msra.mxu0 0.0
    %351 = vmatprep.subr.mxu0 0.0
    %352 = vmatpush1.msra.mxu0 0.0
    %353 = vmatprep.subr.mxu0 0.0
    %354 = vmatpush1.msra.mxu0 0.0
    %355 = vmatprep.subr.mxu0 0.0
    %356 = vmatpush1.msra.mxu0 0.0
    %357 = vmatprep.subr.mxu0 0.0
    %358 = vmatpush1.msra.mxu0 0.0
    %359 = vmatprep.subr.mxu0 0.0
    %360 = vmatpush1.msra.mxu0 0.0
    %361 = vmatprep.subr.mxu0 0.0
    %362 = vmatpush1.msra.mxu0 0.0
    %363 = vmatprep.subr.mxu0 0.0
    %364 = vmatpush1.msra.mxu0 0.0
    %365 = vmatprep.subr.mxu0 0.0
    %366 = vmatpush1.msra.mxu0 0.0
    %367 = vmatprep.subr.mxu0 0.0
    %368 = vmatpush1.msra.mxu0 0.0
    %369 = vmatprep.subr.mxu0 0.0
    %370 = vmatpush1.msra.mxu0 0.0
    %371 = vmatprep.subr.mxu0 0.0
    %372 = vmatpush1.msra.mxu0 0.0
    %373 = vmatprep.subr.mxu0 0.0
    %374 = vmatpush1.msra.mxu0 %v339
    %375 = vmatprep.subr.mxu0 0.0
    %376 = vmatpush1.msra.mxu0 %v337
    %377 = vmatprep.subr.mxu0 0.0
    %378 = vmatpush2.msra.mxu0 0.0
    %379 = vmatprep.subr.mxu0 0.0
    %380 = vmatpush2.msra.mxu0 0.0
    %381 = vmatprep.subr.mxu0 0.0
    %382 = vmatpush2.msra.mxu0 0.0
    %383 = vmatprep.subr.mxu0 0.0
    %384 = vmatpush2.msra.mxu0 0.0
    %385 = vmatprep.subr.mxu0 0.0
    %386 = vmatpush2.msra.mxu0 0.0
    %387 = vmatprep.subr.mxu0 0.0
    %388 = vmatpush2.msra.mxu0 0.0
    %389 = vmatprep.subr.mxu0 0.0
    %390 = vmatpush2.msra.mxu0 0.0
    %391 = vmatprep.subr.mxu0 0.0
    %392 = vmatpush2.msra.mxu0 0.0
    %393 = vmatprep.subr.mxu0 0.0
    %394 = vmatpush2.msra.mxu0 0.0
    %395 = vmatprep.subr.mxu0 0.0
    %396 = vmatpush2.msra.mxu0 0.0
    %397 = vmatprep.subr.mxu0 0.0
    %398 = vmatpush2.msra.mxu0 0.0
    %399 = vmatprep.subr.mxu0 0.0
    %400 = vmatpush2.msra.mxu0 0.0
    %401 = vmatprep.subr.mxu0 0.0
    %402 = vmatpush2.msra.mxu0 0.0
    %403 = vmatprep.subr.mxu0 0.0
    %404 = vmatpush2.msra.mxu0 0.0
    %405 = vmatprep.subr.mxu0 0.0
    %406 = vmatpush2.msra.mxu0 0.0
    %407 = vmatprep.subr.mxu0 0.0
    %408 = vmatpush2.msra.mxu0 0.0
    %409 = vmatprep.mubr.f32.mxu0 0.0
    %410 = vmatmul.mubr.f32.gmra.mxu0 %v343
    %v411 = vpop.f32.mrf.mxu0
    %v412 = vadd.f32 0.0, %v411
    %v413 = vpop.f32.mrf.mxu0
    %414 = vdwg.mxu0
    %415 = vrot.lane.b32.xlu0 %v155, 112
    %v416 = vpop.permute.xlu0 %415
    %417 = vrot.lane.b32.xlu0 %v235, 112
    %v418 = vpop.permute.xlu0 %417
    %419 = vrot.lane.b32.xlu0 %v240, 112
    %v420 = vpop.permute.xlu0 %419
    %v421 = vsel %vm243, %v416, 0
    %v423 = vsel %vm243, %v418, 0
    %v425 = vsel %vm243, %v420, 0
    %427 = vmatprep.subr.mxu0 0.0
    %428 = vmatpush1.xpose.msra.mxu0 0.0
    %429 = vmatprep.subr.mxu0 0.0
    %430 = vmatpush1.xpose.msra.mxu0 0.0
    %431 = vmatprep.subr.mxu0 0.0
    %432 = vmatpush1.xpose.msra.mxu0 0.0
    %433 = vmatprep.subr.mxu0 0.0
    %434 = vmatpush1.xpose.msra.mxu0 0.0
    %435 = vmatprep.subr.mxu0 0.0
    %436 = vmatpush1.xpose.msra.mxu0 0.0
    %437 = vmatprep.subr.mxu0 0.0
    %438 = vmatpush1.xpose.msra.mxu0 0.0
    %439 = vmatprep.subr.mxu0 0.0
    %440 = vmatpush1.xpose.msra.mxu0 0.0
    %441 = vmatprep.subr.mxu0 0.0
    %442 = vmatpush1.xpose.msra.mxu0 0.0
    %443 = vmatprep.subr.mxu0 0.0
    %444 = vmatpush1.xpose.msra.mxu0 0.0
    %445 = vmatprep.subr.mxu0 0.0
    %446 = vmatpush1.xpose.msra.mxu0 0.0
    %447 = vmatprep.subr.mxu0 0.0
    %448 = vmatpush1.xpose.msra.mxu0 0.0
    %449 = vmatprep.subr.mxu0 0.0
    %450 = vmatpush1.xpose.msra.mxu0 0.0
    %451 = vmatprep.subr.mxu0 0.0
    %452 = vmatpush1.xpose.msra.mxu0 0.0
    %453 = vmatprep.subr.mxu0 0.0
    %454 = vmatpush1.xpose.msra.mxu0 0.0
    %455 = vmatprep.subr.mxu0 0.0
    %456 = vmatpush1.xpose.msra.mxu0 %v425
    %457 = vmatprep.subr.mxu0 0.0
    %458 = vmatpush1.xpose.msra.mxu0 %v423
    %459 = vmatprep.subr.mxu0 0.0
    %460 = vmatpush2.xpose.msra.mxu0 0.0
    %461 = vmatprep.subr.mxu0 0.0
    %462 = vmatpush2.xpose.msra.mxu0 0.0
    %463 = vmatprep.subr.mxu0 0.0
    %464 = vmatpush2.xpose.msra.mxu0 0.0
    %465 = vmatprep.subr.mxu0 0.0
    %466 = vmatpush2.xpose.msra.mxu0 0.0
    %467 = vmatprep.subr.mxu0 0.0
    %468 = vmatpush2.xpose.msra.mxu0 0.0
    %469 = vmatprep.subr.mxu0 0.0
    %470 = vmatpush2.xpose.msra.mxu0 0.0
    %471 = vmatprep.subr.mxu0 0.0
    %472 = vmatpush2.xpose.msra.mxu0 0.0
    %473 = vmatprep.subr.mxu0 0.0
    %474 = vmatpush2.xpose.msra.mxu0 0.0
    %475 = vmatprep.subr.mxu0 0.0
    %476 = vmatpush2.xpose.msra.mxu0 0.0
    %477 = vmatprep.subr.mxu0 0.0
    %478 = vmatpush2.xpose.msra.mxu0 0.0
    %479 = vmatprep.subr.mxu0 0.0
    %480 = vmatpush2.xpose.msra.mxu0 0.0
    %481 = vmatprep.subr.mxu0 0.0
    %482 = vmatpush2.xpose.msra.mxu0 0.0
    %483 = vmatprep.subr.mxu0 0.0
    %484 = vmatpush2.xpose.msra.mxu0 0.0
    %485 = vmatprep.subr.mxu0 0.0
    %486 = vmatpush2.xpose.msra.mxu0 0.0
    %487 = vmatprep.subr.mxu0 0.0
    %488 = vmatpush2.xpose.msra.mxu0 0.0
    %489 = vmatprep.subr.mxu0 0.0
    %490 = vmatpush2.xpose.msra.mxu0 0.0
    %491 = vmatprep.mubr.f32.mxu0 0.0
    %492 = vmatmul.mubr.f32.gmra.mxu0 %v421
    %v493 = vpop.f32.mrf.mxu0
    %v494 = vadd.f32 0.0, %v493
    %v495 = vpop.f32.mrf.mxu0
    %496 = vdwg.mxu0
    %v497 = vmul.f32 %v494, 0.25
    %v498 = vsel %vm243, %v497, -inf
    %499 = vmax.xlane.f32.xlu0 %v498
    %v500 = vpop.xlane.xlu0 %499
    %v501 = vsub.f32 %v497, %v500
    %v502 = vmul.f32 %v501, 1.442695
    %v503 = vpow.pop %v502
    %v504 = vsel %vm243, %v503, 0.0
    %505 = vadd.xlane.f32.xlu0 %v504
    %v506 = vpop.xlane.xlu0 %505
    %v507 = vrcp.pop %v506
    %v508 = vmul.f32 1.0, %v507
    %v509 = vmul.f32 %v503, %v508
    %510 = vrot.lane.b32.xlu0 %v235, 80
    %v511 = vpop.permute.xlu0 %510
    %512 = vrot.lane.b32.xlu0 %v240, 80
    %v513 = vpop.permute.xlu0 %512
    %v517 = vsel %vm243, %v509, 0
    %519 = vmatprep.subr.mxu0 0.0
    %520 = vmatpush1.msra.mxu0 0.0
    %521 = vmatprep.subr.mxu0 0.0
    %522 = vmatpush1.msra.mxu0 0.0
    %523 = vmatprep.subr.mxu0 0.0
    %524 = vmatpush1.msra.mxu0 0.0
    %525 = vmatprep.subr.mxu0 0.0
    %526 = vmatpush1.msra.mxu0 0.0
    %527 = vmatprep.subr.mxu0 0.0
    %528 = vmatpush1.msra.mxu0 0.0
    %529 = vmatprep.subr.mxu0 0.0
    %530 = vmatpush1.msra.mxu0 0.0
    %531 = vmatprep.subr.mxu0 0.0
    %532 = vmatpush1.msra.mxu0 0.0
    %533 = vmatprep.subr.mxu0 0.0
    %534 = vmatpush1.msra.mxu0 0.0
    %535 = vmatprep.subr.mxu0 0.0
    %536 = vmatpush1.msra.mxu0 0.0
    %537 = vmatprep.subr.mxu0 0.0
    %538 = vmatpush1.msra.mxu0 0.0
    %539 = vmatprep.subr.mxu0 0.0
    %540 = vmatpush1.msra.mxu0 0.0
    %541 = vmatprep.subr.mxu0 0.0
    %542 = vmatpush1.msra.mxu0 0.0
    %543 = vmatprep.subr.mxu0 0.0
    %544 = vmatpush1.msra.mxu0 0.0
    %545 = vmatprep.subr.mxu0 0.0
    %546 = vmatpush1.msra.mxu0 0.0
    %547 = vmatprep.subr.mxu0 0.0
    %548 = vmatpush1.msra.mxu0 %v513
    %549 = vmatprep.subr.mxu0 0.0
    %550 = vmatpush1.msra.mxu0 %v511
    %551 = vmatprep.subr.mxu0 0.0
    %552 = vmatpush2.msra.mxu0 0.0
    %553 = vmatprep.subr.mxu0 0.0
    %554 = vmatpush2.msra.mxu0 0.0
    %555 = vmatprep.subr.mxu0 0.0
    %556 = vmatpush2.msra.mxu0 0.0
    %557 = vmatprep.subr.mxu0 0.0
    %558 = vmatpush2.msra.mxu0 0.0
    %559 = vmatprep.subr.mxu0 0.0
    %560 = vmatpush2.msra.mxu0 0.0
    %561 = vmatprep.subr.mxu0 0.0
    %562 = vmatpush2.msra.mxu0 0.0
    %563 = vmatprep.subr.mxu0 0.0
    %564 = vmatpush2.msra.mxu0 0.0
    %565 = vmatprep.subr.mxu0 0.0
    %566 = vmatpush2.msra.mxu0 0.0
    %567 = vmatprep.subr.mxu0 0.0
    %568 = vmatpush2.msra.mxu0 0.0
    %569 = vmatprep.subr.mxu0 0.0
    %570 = vmatpush2.msra.mxu0 0.0
    %571 = vmatprep.subr.mxu0 0.0
    %572 = vmatpush2.msra.mxu0 0.0
    %573 = vmatprep.subr.mxu0 0.0
    %574 = vmatpush2.msra.mxu0 0.0
    %575 = vmatprep.subr.mxu0 0.0
    %576 = vmatpush2.msra.mxu0 0.0
    %577 = vmatprep.subr.mxu0 0.0
    %578 = vmatpush2.msra.mxu0 0.0
    %579 = vmatprep.subr.mxu0 0.0
    %580 = vmatpush2.msra.mxu0 0.0
    %581 = vmatprep.subr.mxu0 0.0
    %582 = vmatpush2.msra.mxu0 0.0
    %583 = vmatprep.mubr.f32.mxu0 0.0
    %584 = vmatmul.mubr.f32.gmra.mxu0 %v517
    %v585 = vpop.f32.mrf.mxu0
    %v586 = vadd.f32 0.0, %v585
    %v587 = vpop.f32.mrf.mxu0
    %588 = vdwg.mxu0
    %590 = vrot.lane.b32.xlu0 %v586, 16
    %v591 = vpop.permute.xlu0 %590
    %v593 = vsel %vm243, %v412, %v591
    %v594 = vld [vmem:[#allocation7] sm:$0xff]
    %v595 = vld [vmem:[#allocation7 + $0x8] sm:$0xff]
    %v596 = vld [vmem:[#allocation7 + $0x10] sm:$0xff]
    %v597 = vld [vmem:[#allocation7 + $0x18] sm:$0xff]
    %v599 = vsel %vm84, %v593, 0
    %601 = vmatprep.subr.mxu0 0.0
    %602 = vmatpush1.msra.mxu0 0.0
    %603 = vmatprep.subr.mxu0 0.0
    %604 = vmatpush1.msra.mxu0 0.0
    %605 = vmatprep.subr.mxu0 0.0
    %606 = vmatpush1.msra.mxu0 0.0
    %607 = vmatprep.subr.mxu0 0.0
    %608 = vmatpush1.msra.mxu0 0.0
    %609 = vmatprep.subr.mxu0 0.0
    %610 = vmatpush1.msra.mxu0 0.0
    %611 = vmatprep.subr.mxu0 0.0
    %612 = vmatpush1.msra.mxu0 0.0
    %613 = vmatprep.subr.mxu0 0.0
    %614 = vmatpush1.msra.mxu0 0.0
    %615 = vmatprep.subr.mxu0 0.0
    %616 = vmatpush1.msra.mxu0 0.0
    %617 = vmatprep.subr.mxu0 0.0
    %618 = vmatpush1.msra.mxu0 0.0
    %619 = vmatprep.subr.mxu0 0.0
    %620 = vmatpush1.msra.mxu0 0.0
    %621 = vmatprep.subr.mxu0 0.0
    %622 = vmatpush1.msra.mxu0 0.0
    %623 = vmatprep.subr.mxu0 0.0
    %624 = vmatpush1.msra.mxu0 0.0
    %625 = vmatprep.subr.mxu0 0.0
    %626 = vmatpush1.msra.mxu0 %v597
    %627 = vmatprep.subr.mxu0 0.0
    %628 = vmatpush1.msra.mxu0 %v596
    %629 = vmatprep.subr.mxu0 0.0
    %630 = vmatpush1.msra.mxu0 %v595
    %631 = vmatprep.subr.mxu0 0.0
    %632 = vmatpush1.msra.mxu0 %v594
    %633 = vmatprep.subr.mxu0 0.0
    %634 = vmatpush2.msra.mxu0 0.0
    %635 = vmatprep.subr.mxu0 0.0
    %636 = vmatpush2.msra.mxu0 0.0
    %637 = vmatprep.subr.mxu0 0.0
    %638 = vmatpush2.msra.mxu0 0.0
    %639 = vmatprep.subr.mxu0 0.0
    %640 = vmatpush2.msra.mxu0 0.0
    %641 = vmatprep.subr.mxu0 0.0
    %642 = vmatpush2.msra.mxu0 0.0
    %643 = vmatprep.subr.mxu0 0.0
    %644 = vmatpush2.msra.mxu0 0.0
    %645 = vmatprep.subr.mxu0 0.0
    %646 = vmatpush2.msra.mxu0 0.0
    %647 = vmatprep.subr.mxu0 0.0
    %648 = vmatpush2.msra.mxu0 0.0
    %649 = vmatprep.subr.mxu0 0.0
    %650 = vmatpush2.msra.mxu0 0.0
    %651 = vmatprep.subr.mxu0 0.0
    %652 = vmatpush2.msra.mxu0 0.0
    %653 = vmatprep.subr.mxu0 0.0
    %654 = vmatpush2.msra.mxu0 0.0
    %655 = vmatprep.subr.mxu0 0.0
    %656 = vmatpush2.msra.mxu0 0.0
    %657 = vmatprep.subr.mxu0 0.0
    %658 = vmatpush2.msra.mxu0 0.0
    %659 = vmatprep.subr.mxu0 0.0
    %660 = vmatpush2.msra.mxu0 0.0
    %661 = vmatprep.subr.mxu0 0.0
    %662 = vmatpush2.msra.mxu0 0.0
    %663 = vmatprep.subr.mxu0 0.0
    %664 = vmatpush2.msra.mxu0 0.0
    %665 = vmatprep.mubr.f32.mxu0 0.0
    %666 = vmatmul.mubr.f32.gmra.mxu0 %v599
    %v667 = vpop.f32.mrf.mxu0
    %v668 = vadd.f32 0.0, %v667
    %v669 = vpop.f32.mrf.mxu0
    %670 = vdwg.mxu0
    %v671 = vld [vmem:[#allocation8] sm:$0xff]
    %v672 = vmul.f32 %v671, 0.9
    %v673 = vmul.f32 %v668, 0.1
    %v674 = vadd.f32 %v672, %v673
    %v675 = vmul.f32 %v674, %v674
    %v676 = vsel %vm84, %v675, 0.0
    %677 = vadd.xlane.f32.xlu0 %v676
    %v678 = vpop.xlane.xlu0 %677
    %v679 = vadd.f32 %v678, 1e-12
    %v680 = vrsqrt.pop %v679
    %v681 = vmul.f32 %v674, %v680
    %682 = vst.msk [vmem:[#allocation10] sm:$0xff] %vm84, %v681
    // Predicated region
    $region42: #{tpu_custom_call.1} parent=1 // pred_check
      _
    $region43: #{tpu_custom_call.1} parent=1 // pred_check_branch
      %684 = sbr.rel (0) target = $region45
    $region44: #{tpu_custom_call.1} parent=1 // pred_region
      %s686 = ssub.s32 128, 128
      %687 = vsyncadd [#allocation4], %s686
      %s689 = sshll.u32 [#allocation10], 4
      %s690 = int_to_ptr.vmem [resolvable:$true] %s689
      %692 = dma.vmem_to_hbm [thread:$0]  %s690, 128, %s6, [#allocation4]
    $region45: #{tpu_custom_call.1} parent=1 // pred_fallthru
      _
    // Predicated region
    $region46: #{tpu_custom_call.1} parent=1 // pred_check
      _
    $region47: #{tpu_custom_call.1} parent=1 // pred_check_branch
      %694 = sbr.rel (0) target = $region49
    $region48: #{tpu_custom_call.1} parent=1 // pred_region
      %695 = dma.done [#allocation4], 128
    $region49: #{tpu_custom_call.1} parent=1 // pred_fallthru
      _
    %696 = vsyncpa [#allocation3], 1
    %697 = vsyncpa [#allocation6], 1
    %698 = vsyncpa [#allocation9], 1
    %699 = vsyncpa [#allocation4], 1

</llo_original>
